<compile_context>
chip_gen: v7x
topology: tpu7x:2x2x1
jax: 0.10.0
libtpu: 0.0.40
codegen_flags: <defaults>
</compile_context>

<pallas_src>
import math
from functools import partial

import jax
import jax.numpy as jnp
from jax.experimental import pallas as pl
from jax.experimental.pallas import tpu as pltpu

PAD = 128          # lane-dense working width for every layer
LEAKY_SLOPE = 0.2
BN_EPS = 1e-5
NEG_FILL = -1e30   # masked (padded) logits -> exp() underflows to 0 -> output 0


def generator_kernel(x_ref, w_ref, v_ref, out_ref, *, img_size, latent):
    """Processes ONE independent mini-batch (one semantic batch) per grid step.

    x_ref:   (B, latent)   f32   latent input for this group (pipelined per step)
    w_ref:   (3, 128, 128) bf16  zero-padded [W2, W3, Wf_main], VMEM-resident
    v_ref:   (12+latent, 128) f32 rows 0-8: (bias, gamma, beta) per extractor layer,
                                  9: MBD T row, 10: Wf column for the MBD feature,
                                  11: final bias, 12..: W1 rows (latent x dim1, padded)
    out_ref: (B, 128)      f32   hard 0/1 output (valid in the first img_size lanes)
    """
    B = out_ref.shape[0]
    inv_b = 1.0 / B

    def leaky_bn(h, layer):
        # LeakyReLU(0.2) then BatchNorm1d (training-mode batch stats, biased var),
        # centered two-pass variance folded into a single scale/shift.
        gamma = v_ref[3 * layer + 1:3 * layer + 2, :]    # (1, 128), zero-padded
        beta = v_ref[3 * layer + 2:3 * layer + 3, :]
        h = jnp.where(h > 0, h, LEAKY_SLOPE * h)
        mean = jnp.sum(h, axis=0, keepdims=True) * inv_b
        d = h - mean
        var = jnp.sum(d * d, axis=0, keepdims=True) * inv_b
        return d * (gamma * jax.lax.rsqrt(var + BN_EPS)) + beta   # padded lanes stay 0

    # --- layer 1: Linear(latent -> 8). K = latent (4) is tiny -> VPU broadcast-MAC,
    #     no MXU pass and no wrapper-side zero padding of x needed. ---
    x0 = x_ref[...]                                           # (B, latent) f32
    h = v_ref[0:1, :] + x0[:, 0:1] * v_ref[12:13, :]          # bias + first W1 row
    for k in range(1, latent):
        h = h + x0[:, k:k + 1] * v_ref[12 + k:13 + k, :]
    h = leaky_bn(h, 0)

    # --- layers 2, 3: lane-dense 128x128 bf16 matmuls on the MXU, f32 accumulate ---
    for layer in (1, 2):
        h = (jnp.dot(h.astype(jnp.bfloat16), w_ref[layer - 1],
                     preferred_element_type=jnp.float32)
             + v_ref[3 * layer:3 * layer + 1, :])
        h = leaky_bn(h, layer)

    feats = h                                                 # (B, 128), valid cols [0, 32)

    # --- MiniBatchDiscrimination (out_features=1, kernel_dim=1): VPU mul + lane reduce ---
    t_row = v_ref[9:10, :]                                    # (1, 128), zero-padded T row
    m = jnp.sum(feats * t_row, axis=1, keepdims=True)         # (B, 1)
    # TODO(synk): for very large per-group batch, block this pairwise sum over lane tiles
    # instead of materializing the (B, B) matrix (v7x 64 MiB VMEM / v5e 16 MiB scoped cliff).
    c = jnp.exp(-jnp.abs(m - m.T))                            # (B, B) pairwise similarity
    mbd = jnp.sum(c, axis=1, keepdims=True) - 1.0             # (B, 1), drop self term

    # --- new_final_layer: Linear([feats, mbd] -> img_size) as a split matmul ---
    wf_mbd = v_ref[10:11, :]                                  # (1, 128) weight row for mbd
    bf = v_ref[11:12, :]                                      # (1, 128) final bias
    logits = (jnp.dot(feats.astype(jnp.bfloat16), w_ref[2],
                      preferred_element_type=jnp.float32)
              + mbd * wf_mbd + bf)
    # Explicit lane mask for the padded output columns (robust vs. packing changes).
    lane = jax.lax.broadcasted_iota(jnp.int32, logits.shape, 1)
    logits = jnp.where(lane < img_size, logits, NEG_FILL)

    # --- Softmax(dim=1) + BinaryStraightThrough(1/img_size), division removed ---
    mx = jnp.max(logits, axis=1, keepdims=True)
    e = jnp.exp(logits - mx)
    s = jnp.sum(e, axis=1, keepdims=True)
    out_ref[...] = (e > s * (1.0 / img_size)).astype(jnp.float32)


@partial(jax.jit, static_argnames=("img_size",))
def generator_softmax_stembd(x, wslab, vslab, img_size):
    """x: (groups, batch, latent) — a stack of `groups` independent mini-batches.
    Each group is one full semantic batch (BatchNorm / MBD statistics stay inside it).
    Returns the lane-dense (groups, batch, 128) hard 0/1 output; the valid image is in
    lanes [0, img_size) — slice / consume downstream of the kernel."""
    groups, batch, latent = x.shape
    return pl.pallas_call(
        partial(generator_kernel, img_size=img_size, latent=latent),
        out_shape=jax.ShapeDtypeStruct((groups, batch, PAD), jnp.float32),
        grid=(groups,),
        in_specs=[
            # per-group latent block pipelines across grid steps
            pl.BlockSpec((None, batch, latent), lambda g: (g, 0, 0)),
            # parameter slabs: constant index_map -> DMA'd once, VMEM-resident across steps
            pl.BlockSpec(wslab.shape, lambda g: (0, 0, 0)),
            pl.BlockSpec(vslab.shape, lambda g: (0, 0)),
        ],
        out_specs=pl.BlockSpec((None, batch, PAD), lambda g: (g, 0, 0)),
        # independent groups -> shard across both TensorCores on v7x; neutral on v5e/v6e.
        # TODO(synk): set vmem_limit_bytes explicitly here if the per-group batch is
        # scaled up (v5e's default scoped VMEM is only 16 MiB).
        compiler_params=pltpu.CompilerParams(dimension_semantics=("parallel",)),
    )(x, wslab, vslab)


def make_params(key, latent_size, img_size):
    """Deterministic synthetic parameters matching the module's __init__ shapes."""
    amount_layers = 4
    increase = math.log(img_size / latent_size, amount_layers)

    def dim(layer_num):
        return max(round(pow(increase, layer_num) * latent_size), 1)

    params = []
    keys = jax.random.split(key, 8)
    # feature_extractor: layers 1..3  (Linear -> LeakyReLU -> BatchNorm1d)
    for layer in range(1, amount_layers):
        d_in, d_out = dim(layer - 1), dim(layer)
        kw, kb = jax.random.split(keys[layer - 1])
        w = jax.random.normal(kw, (d_in, d_out), jnp.float32) / math.sqrt(d_in)
        b = jax.random.normal(kb, (1, d_out), jnp.float32) * 0.01
        gamma = jnp.ones((1, d_out), jnp.float32)    # BatchNorm1d default weight
        beta = jnp.zeros((1, d_out), jnp.float32)    # BatchNorm1d default bias
        params += [w, b, gamma, beta]

    in_features = dim(amount_layers - 1)             # final layer's Linear in_features
    mbd_out_features, mbd_kernel_dim = 1, 1

    # MiniBatchDiscrimination.T : (in_features, out_features * kernel_dim)
    t = jax.random.normal(keys[3], (in_features, mbd_out_features * mbd_kernel_dim),
                          jnp.float32)

    # new_final_layer: Linear(in_features + mbd_out_features, img_size)
    kwf, kbf = jax.random.split(keys[4])
    wf = jax.random.normal(kwf, (in_features + mbd_out_features, img_size), jnp.float32) \
        / math.sqrt(in_features + mbd_out_features)
    bf = jax.random.normal(kbf, (1, img_size), jnp.float32) * 0.01

    params += [t, wf, bf]
    return tuple(params)


def pack_params(params):
    """One-time packing of the 15 raw tensors into 2 lane-dense slabs (outside the step)."""
    (w1, b1, g1, be1, w2, b2, g2, be2, w3, b3, g3, be3, t, wf, bf) = params

    def pad_mat(w):
        return jnp.zeros((PAD, PAD), jnp.float32).at[:w.shape[0], :w.shape[1]].set(w)

    def pad_rows(m, rows):
        return jnp.zeros((rows, PAD), jnp.float32).at[:m.shape[0], :m.shape[1]].set(m)

    wf_main, wf_mbd = wf[:-1, :], wf[-1:, :]
    # bf16 MXU weight slab: [W2, W3, Wf_main]. W1 (latent x dim1) is tiny and lives in
    # the f32 row slab instead (used by the in-kernel VPU broadcast-MAC first layer).
    wslab = jnp.stack([pad_mat(w2), pad_mat(w3), pad_mat(wf_main)],
                      axis=0).astype(jnp.bfloat16)
    rows = [b1, g1, be1, b2, g2, be2, b3, g3, be3, t.T, wf_mbd, bf]
    vslab = jnp.concatenate([pad_rows(r, 1) for r in rows]
                            + [pad_rows(w1, w1.shape[0])], axis=0)   # (12+latent, 128) f32
    return wslab, vslab


if __name__ == "__main__":
    latent_size, img_size = 4, 64
    groups, batch = 4, 8          # 4 independent mini-batches of 8 samples each

    key = jax.random.PRNGKey(0)
    kx, kp = jax.random.split(key)
    params = make_params(kp, latent_size, img_size)
    wslab, vslab = pack_params(params)           # one-time packing, outside the step
    x = jax.random.normal(kx, (groups, batch, latent_size), jnp.float32)

    out_pad = generator_softmax_stembd(x, wslab, vslab, img_size)
    out_pad = jax.block_until_ready(out_pad)

    out = out_pad[..., :img_size]                # consume / slice downstream of the kernel
    assert out_pad.shape == (groups, batch, PAD)
    assert out.shape == (groups, batch, img_size)
    assert out.dtype == jnp.float32
    # output of BinaryStraightThrough forward is strictly {0.0, 1.0}
    assert bool(jnp.all((out == 0.0) | (out == 1.0)))
    # padded lanes carry exact zeros
    assert bool(jnp.all(out_pad[..., img_size:] == 0.0))
    print("KERNEL_OK")
</pallas_src>

<mosaic_0001>
module attributes {stable_mosaic.version = 11 : i64} {
  func.func @generator_kernel(%arg0: i32, %arg1: memref<1x8x4xf32, #tpu.memory_space<vmem>>, %arg2: memref<3x128x128xbf16, #tpu.memory_space<vmem>>, %arg3: memref<16x128xf32, #tpu.memory_space<vmem>>, %arg4: memref<1x8x128xf32, #tpu.memory_space<vmem>>) attributes {dimension_semantics = [#tpu.dimension_semantics<parallel>], iteration_bounds = array<i64: 4>, scalar_prefetch = 0 : i64, scratch_operands = 0 : i64, tpu.core_type = #tpu.core_type<tc>, window_params = [{transform_indices = @transform_0, window_bounds = array<i64: 1, 8, 4>}, {pipeline_mode = #tpu.pipeline_mode<synchronous>, transform_indices = @transform_1, window_bounds = array<i64: 3, 128, 128>}, {pipeline_mode = #tpu.pipeline_mode<synchronous>, transform_indices = @transform_2, window_bounds = array<i64: 16, 128>}, {transform_indices = @transform_3, window_bounds = array<i64: 1, 8, 128>}]} {
    %c0 = arith.constant 0 : index
    %c0_0 = arith.constant 0 : index
    %c0_1 = arith.constant 0 : index
    %0 = vector.load %arg1[%c0, %c0_0, %c0_1] : memref<1x8x4xf32, #tpu.memory_space<vmem>>, vector<1x8x4xf32>
    %1 = vector.shape_cast %0 : vector<1x8x4xf32> to vector<8x4xf32>
    %c0_2 = arith.constant 0 : index
    %c0_3 = arith.constant 0 : index
    %2 = vector.load %arg3[%c0_2, %c0_3] : memref<16x128xf32, #tpu.memory_space<vmem>>, vector<1x128xf32>
    %3 = vector.extract_strided_slice %1 {offsets = [0, 0], sizes = [8, 1], strides = [1, 1]} : vector<8x4xf32> to vector<8x1xf32>
    %c12 = arith.constant 12 : index
    %c0_4 = arith.constant 0 : index
    %4 = vector.load %arg3[%c12, %c0_4] : memref<16x128xf32, #tpu.memory_space<vmem>>, vector<1x128xf32>
    %5 = vector.broadcast %3 : vector<8x1xf32> to vector<8x128xf32>
    %6 = vector.broadcast %4 : vector<1x128xf32> to vector<8x128xf32>
    %7 = arith.mulf %5, %6 : vector<8x128xf32>
    %8 = vector.broadcast %2 : vector<1x128xf32> to vector<8x128xf32>
    %9 = arith.addf %8, %7 : vector<8x128xf32>
    %10 = vector.extract_strided_slice %1 {offsets = [0, 1], sizes = [8, 1], strides = [1, 1]} : vector<8x4xf32> to vector<8x1xf32>
    %c13 = arith.constant 13 : index
    %c0_5 = arith.constant 0 : index
    %11 = vector.load %arg3[%c13, %c0_5] : memref<16x128xf32, #tpu.memory_space<vmem>>, vector<1x128xf32>
    %12 = vector.broadcast %10 : vector<8x1xf32> to vector<8x128xf32>
    %13 = vector.broadcast %11 : vector<1x128xf32> to vector<8x128xf32>
    %14 = arith.mulf %12, %13 : vector<8x128xf32>
    %15 = arith.addf %9, %14 : vector<8x128xf32>
    %16 = vector.extract_strided_slice %1 {offsets = [0, 2], sizes = [8, 1], strides = [1, 1]} : vector<8x4xf32> to vector<8x1xf32>
    %c14 = arith.constant 14 : index
    %c0_6 = arith.constant 0 : index
    %17 = vector.load %arg3[%c14, %c0_6] : memref<16x128xf32, #tpu.memory_space<vmem>>, vector<1x128xf32>
    %18 = vector.broadcast %16 : vector<8x1xf32> to vector<8x128xf32>
    %19 = vector.broadcast %17 : vector<1x128xf32> to vector<8x128xf32>
    %20 = arith.mulf %18, %19 : vector<8x128xf32>
    %21 = arith.addf %15, %20 : vector<8x128xf32>
    %22 = vector.extract_strided_slice %1 {offsets = [0, 3], sizes = [8, 1], strides = [1, 1]} : vector<8x4xf32> to vector<8x1xf32>
    %c15 = arith.constant 15 : index
    %c0_7 = arith.constant 0 : index
    %23 = vector.load %arg3[%c15, %c0_7] : memref<16x128xf32, #tpu.memory_space<vmem>>, vector<1x128xf32>
    %24 = vector.broadcast %22 : vector<8x1xf32> to vector<8x128xf32>
    %25 = vector.broadcast %23 : vector<1x128xf32> to vector<8x128xf32>
    %26 = arith.mulf %24, %25 : vector<8x128xf32>
    %27 = arith.addf %21, %26 : vector<8x128xf32>
    %c1 = arith.constant 1 : index
    %c0_8 = arith.constant 0 : index
    %28 = vector.load %arg3[%c1, %c0_8] : memref<16x128xf32, #tpu.memory_space<vmem>>, vector<1x128xf32>
    %c2 = arith.constant 2 : index
    %c0_9 = arith.constant 0 : index
    %29 = vector.load %arg3[%c2, %c0_9] : memref<16x128xf32, #tpu.memory_space<vmem>>, vector<1x128xf32>
    %cst = arith.constant 0.000000e+00 : f32
    %30 = vector.broadcast %cst : f32 to vector<8x128xf32>
    %31 = arith.cmpf ogt, %27, %30 : vector<8x128xf32>
    %cst_10 = arith.constant 2.000000e-01 : f32
    %32 = vector.broadcast %cst_10 : f32 to vector<8x128xf32>
    %33 = arith.mulf %32, %27 : vector<8x128xf32>
    %34 = arith.select %31, %27, %33 : vector<8x128xi1>, vector<8x128xf32>
    %cst_11 = arith.constant dense<0.000000e+00> : vector<128xf32>
    %35 = vector.multi_reduction <add>, %34, %cst_11 [0] : vector<8x128xf32> to vector<128xf32>
    %36 = vector.shape_cast %35 : vector<128xf32> to vector<1x128xf32>
    %cst_12 = arith.constant 1.250000e-01 : f32
    %37 = vector.broadcast %cst_12 : f32 to vector<1x128xf32>
    %38 = arith.mulf %36, %37 : vector<1x128xf32>
    %39 = vector.broadcast %38 : vector<1x128xf32> to vector<8x128xf32>
    %40 = arith.subf %34, %39 : vector<8x128xf32>
    %41 = arith.mulf %40, %40 : vector<8x128xf32>
    %cst_13 = arith.constant dense<0.000000e+00> : vector<128xf32>
    %42 = vector.multi_reduction <add>, %41, %cst_13 [0] : vector<8x128xf32> to vector<128xf32>
    %43 = vector.shape_cast %42 : vector<128xf32> to vector<1x128xf32>
    %cst_14 = arith.constant 1.250000e-01 : f32
    %44 = vector.broadcast %cst_14 : f32 to vector<1x128xf32>
    %45 = arith.mulf %43, %44 : vector<1x128xf32>
    %cst_15 = arith.constant 9.99999974E-6 : f32
    %46 = vector.broadcast %cst_15 : f32 to vector<1x128xf32>
    %47 = arith.addf %45, %46 : vector<1x128xf32>
    %48 = math.rsqrt %47 : vector<1x128xf32>
    %49 = arith.mulf %28, %48 : vector<1x128xf32>
    %50 = vector.broadcast %49 : vector<1x128xf32> to vector<8x128xf32>
    %51 = arith.mulf %40, %50 : vector<8x128xf32>
    %52 = vector.broadcast %29 : vector<1x128xf32> to vector<8x128xf32>
    %53 = arith.addf %51, %52 : vector<8x128xf32>
    %54 = arith.truncf %53 : vector<8x128xf32> to vector<8x128xbf16>
    %c0_16 = arith.constant 0 : index
    %c0_17 = arith.constant 0 : index
    %c0_18 = arith.constant 0 : index
    %55 = vector.load %arg2[%c0_16, %c0_17, %c0_18] : memref<3x128x128xbf16, #tpu.memory_space<vmem>>, vector<1x128x128xbf16>
    %56 = vector.shape_cast %55 : vector<1x128x128xbf16> to vector<128x128xbf16>
    %cst_19 = arith.constant dense<0.000000e+00> : vector<8x128xf32>
    %57 = tpu.matmul %54, %56, %cst_19 {dimension_numbers = #tpu.dot_dimension_numbers<[1], [0], [0], [1], [0, 0, 1, 1], [], []>} : vector<8x128xbf16>, vector<128x128xbf16>, vector<8x128xf32> -> vector<8x128xf32>
    %c3 = arith.constant 3 : index
    %c0_20 = arith.constant 0 : index
    %58 = vector.load %arg3[%c3, %c0_20] : memref<16x128xf32, #tpu.memory_space<vmem>>, vector<1x128xf32>
    %59 = vector.broadcast %58 : vector<1x128xf32> to vector<8x128xf32>
    %60 = arith.addf %57, %59 : vector<8x128xf32>
    %c4 = arith.constant 4 : index
    %c0_21 = arith.constant 0 : index
    %61 = vector.load %arg3[%c4, %c0_21] : memref<16x128xf32, #tpu.memory_space<vmem>>, vector<1x128xf32>
    %c5 = arith.constant 5 : index
    %c0_22 = arith.constant 0 : index
    %62 = vector.load %arg3[%c5, %c0_22] : memref<16x128xf32, #tpu.memory_space<vmem>>, vector<1x128xf32>
    %cst_23 = arith.constant 0.000000e+00 : f32
    %63 = vector.broadcast %cst_23 : f32 to vector<8x128xf32>
    %64 = arith.cmpf ogt, %60, %63 : vector<8x128xf32>
    %cst_24 = arith.constant 2.000000e-01 : f32
    %65 = vector.broadcast %cst_24 : f32 to vector<8x128xf32>
    %66 = arith.mulf %65, %60 : vector<8x128xf32>
    %67 = arith.select %64, %60, %66 : vector<8x128xi1>, vector<8x128xf32>
    %cst_25 = arith.constant dense<0.000000e+00> : vector<128xf32>
    %68 = vector.multi_reduction <add>, %67, %cst_25 [0] : vector<8x128xf32> to vector<128xf32>
    %69 = vector.shape_cast %68 : vector<128xf32> to vector<1x128xf32>
    %cst_26 = arith.constant 1.250000e-01 : f32
    %70 = vector.broadcast %cst_26 : f32 to vector<1x128xf32>
    %71 = arith.mulf %69, %70 : vector<1x128xf32>
    %72 = vector.broadcast %71 : vector<1x128xf32> to vector<8x128xf32>
    %73 = arith.subf %67, %72 : vector<8x128xf32>
    %74 = arith.mulf %73, %73 : vector<8x128xf32>
    %cst_27 = arith.constant dense<0.000000e+00> : vector<128xf32>
    %75 = vector.multi_reduction <add>, %74, %cst_27 [0] : vector<8x128xf32> to vector<128xf32>
    %76 = vector.shape_cast %75 : vector<128xf32> to vector<1x128xf32>
    %cst_28 = arith.constant 1.250000e-01 : f32
    %77 = vector.broadcast %cst_28 : f32 to vector<1x128xf32>
    %78 = arith.mulf %76, %77 : vector<1x128xf32>
    %cst_29 = arith.constant 9.99999974E-6 : f32
    %79 = vector.broadcast %cst_29 : f32 to vector<1x128xf32>
    %80 = arith.addf %78, %79 : vector<1x128xf32>
    %81 = math.rsqrt %80 : vector<1x128xf32>
    %82 = arith.mulf %61, %81 : vector<1x128xf32>
    %83 = vector.broadcast %82 : vector<1x128xf32> to vector<8x128xf32>
    %84 = arith.mulf %73, %83 : vector<8x128xf32>
    %85 = vector.broadcast %62 : vector<1x128xf32> to vector<8x128xf32>
    %86 = arith.addf %84, %85 : vector<8x128xf32>
    %87 = arith.truncf %86 : vector<8x128xf32> to vector<8x128xbf16>
    %c1_30 = arith.constant 1 : index
    %c0_31 = arith.constant 0 : index
    %c0_32 = arith.constant 0 : index
    %88 = vector.load %arg2[%c1_30, %c0_31, %c0_32] : memref<3x128x128xbf16, #tpu.memory_space<vmem>>, vector<1x128x128xbf16>
    %89 = vector.shape_cast %88 : vector<1x128x128xbf16> to vector<128x128xbf16>
    %cst_33 = arith.constant dense<0.000000e+00> : vector<8x128xf32>
    %90 = tpu.matmul %87, %89, %cst_33 {dimension_numbers = #tpu.dot_dimension_numbers<[1], [0], [0], [1], [0, 0, 1, 1], [], []>} : vector<8x128xbf16>, vector<128x128xbf16>, vector<8x128xf32> -> vector<8x128xf32>
    %c6 = arith.constant 6 : index
    %c0_34 = arith.constant 0 : index
    %91 = vector.load %arg3[%c6, %c0_34] : memref<16x128xf32, #tpu.memory_space<vmem>>, vector<1x128xf32>
    %92 = vector.broadcast %91 : vector<1x128xf32> to vector<8x128xf32>
    %93 = arith.addf %90, %92 : vector<8x128xf32>
    %c7 = arith.constant 7 : index
    %c0_35 = arith.constant 0 : index
    %94 = vector.load %arg3[%c7, %c0_35] : memref<16x128xf32, #tpu.memory_space<vmem>>, vector<1x128xf32>
    %c8 = arith.constant 8 : index
    %c0_36 = arith.constant 0 : index
    %95 = vector.load %arg3[%c8, %c0_36] : memref<16x128xf32, #tpu.memory_space<vmem>>, vector<1x128xf32>
    %cst_37 = arith.constant 0.000000e+00 : f32
    %96 = vector.broadcast %cst_37 : f32 to vector<8x128xf32>
    %97 = arith.cmpf ogt, %93, %96 : vector<8x128xf32>
    %cst_38 = arith.constant 2.000000e-01 : f32
    %98 = vector.broadcast %cst_38 : f32 to vector<8x128xf32>
    %99 = arith.mulf %98, %93 : vector<8x128xf32>
    %100 = arith.select %97, %93, %99 : vector<8x128xi1>, vector<8x128xf32>
    %cst_39 = arith.constant dense<0.000000e+00> : vector<128xf32>
    %101 = vector.multi_reduction <add>, %100, %cst_39 [0] : vector<8x128xf32> to vector<128xf32>
    %102 = vector.shape_cast %101 : vector<128xf32> to vector<1x128xf32>
    %cst_40 = arith.constant 1.250000e-01 : f32
    %103 = vector.broadcast %cst_40 : f32 to vector<1x128xf32>
    %104 = arith.mulf %102, %103 : vector<1x128xf32>
    %105 = vector.broadcast %104 : vector<1x128xf32> to vector<8x128xf32>
    %106 = arith.subf %100, %105 : vector<8x128xf32>
    %107 = arith.mulf %106, %106 : vector<8x128xf32>
    %cst_41 = arith.constant dense<0.000000e+00> : vector<128xf32>
    %108 = vector.multi_reduction <add>, %107, %cst_41 [0] : vector<8x128xf32> to vector<128xf32>
    %109 = vector.shape_cast %108 : vector<128xf32> to vector<1x128xf32>
    %cst_42 = arith.constant 1.250000e-01 : f32
    %110 = vector.broadcast %cst_42 : f32 to vector<1x128xf32>
    %111 = arith.mulf %109, %110 : vector<1x128xf32>
    %cst_43 = arith.constant 9.99999974E-6 : f32
    %112 = vector.broadcast %cst_43 : f32 to vector<1x128xf32>
    %113 = arith.addf %111, %112 : vector<1x128xf32>
    %114 = math.rsqrt %113 : vector<1x128xf32>
    %115 = arith.mulf %94, %114 : vector<1x128xf32>
    %116 = vector.broadcast %115 : vector<1x128xf32> to vector<8x128xf32>
    %117 = arith.mulf %106, %116 : vector<8x128xf32>
    %118 = vector.broadcast %95 : vector<1x128xf32> to vector<8x128xf32>
    %119 = arith.addf %117, %118 : vector<8x128xf32>
    %c9 = arith.constant 9 : index
    %c0_44 = arith.constant 0 : index
    %120 = vector.load %arg3[%c9, %c0_44] : memref<16x128xf32, #tpu.memory_space<vmem>>, vector<1x128xf32>
    %121 = vector.broadcast %120 : vector<1x128xf32> to vector<8x128xf32>
    %122 = arith.mulf %119, %121 : vector<8x128xf32>
    %cst_45 = arith.constant dense<0.000000e+00> : vector<8xf32>
    %123 = vector.multi_reduction <add>, %122, %cst_45 [1] : vector<8x128xf32> to vector<8xf32>
    %124 = vector.shape_cast %123 : vector<8xf32> to vector<8x1xf32>
    %125 = tpu.transpose %124, [1, 0] : vector<8x1xf32> -> vector<1x8xf32>
    %126 = vector.broadcast %124 : vector<8x1xf32> to vector<8x8xf32>
    %127 = vector.broadcast %125 : vector<1x8xf32> to vector<8x8xf32>
    %128 = arith.subf %126, %127 : vector<8x8xf32>
    %129 = math.absf %128 : vector<8x8xf32>
    %cst_46 = arith.constant 0.000000e+00 : f32
    %130 = vector.broadcast %cst_46 : f32 to vector<8x8xf32>
    %131 = arith.subf %130, %129 : vector<8x8xf32>
    %132 = math.exp %131 : vector<8x8xf32>
    %cst_47 = arith.constant dense<0.000000e+00> : vector<8xf32>
    %133 = vector.multi_reduction <add>, %132, %cst_47 [1] : vector<8x8xf32> to vector<8xf32>
    %134 = vector.shape_cast %133 : vector<8xf32> to vector<8x1xf32>
    %cst_48 = arith.constant 1.000000e+00 : f32
    %135 = vector.broadcast %cst_48 : f32 to vector<8x1xf32>
    %136 = arith.subf %134, %135 : vector<8x1xf32>
    %c10 = arith.constant 10 : index
    %c0_49 = arith.constant 0 : index
    %137 = vector.load %arg3[%c10, %c0_49] : memref<16x128xf32, #tpu.memory_space<vmem>>, vector<1x128xf32>
    %c11 = arith.constant 11 : index
    %c0_50 = arith.constant 0 : index
    %138 = vector.load %arg3[%c11, %c0_50] : memref<16x128xf32, #tpu.memory_space<vmem>>, vector<1x128xf32>
    %139 = arith.truncf %119 : vector<8x128xf32> to vector<8x128xbf16>
    %c2_51 = arith.constant 2 : index
    %c0_52 = arith.constant 0 : index
    %c0_53 = arith.constant 0 : index
    %140 = vector.load %arg2[%c2_51, %c0_52, %c0_53] : memref<3x128x128xbf16, #tpu.memory_space<vmem>>, vector<1x128x128xbf16>
    %141 = vector.shape_cast %140 : vector<1x128x128xbf16> to vector<128x128xbf16>
    %cst_54 = arith.constant dense<0.000000e+00> : vector<8x128xf32>
    %142 = tpu.matmul %139, %141, %cst_54 {dimension_numbers = #tpu.dot_dimension_numbers<[1], [0], [0], [1], [0, 0, 1, 1], [], []>} : vector<8x128xbf16>, vector<128x128xbf16>, vector<8x128xf32> -> vector<8x128xf32>
    %143 = vector.broadcast %136 : vector<8x1xf32> to vector<8x128xf32>
    %144 = vector.broadcast %137 : vector<1x128xf32> to vector<8x128xf32>
    %145 = arith.mulf %143, %144 : vector<8x128xf32>
    %146 = arith.addf %142, %145 : vector<8x128xf32>
    %147 = vector.broadcast %138 : vector<1x128xf32> to vector<8x128xf32>
    %148 = arith.addf %146, %147 : vector<8x128xf32>
    %149 = tpu.iota {dimensions = array<i32: 1>} : vector<8x128xi32>
    %c64_i32 = arith.constant 64 : i32
    %150 = vector.broadcast %c64_i32 : i32 to vector<8x128xi32>
    %151 = arith.cmpi slt, %149, %150 : vector<8x128xi32>
    %cst_55 = arith.constant -1.000000e+30 : f32
    %152 = vector.broadcast %cst_55 : f32 to vector<8x128xf32>
    %153 = arith.select %151, %148, %152 : vector<8x128xi1>, vector<8x128xf32>
    %cst_56 = arith.constant dense<0xFF800000> : vector<8xf32>
    %154 = vector.multi_reduction <maximumf>, %153, %cst_56 [1] : vector<8x128xf32> to vector<8xf32>
    %155 = vector.shape_cast %154 : vector<8xf32> to vector<8x1xf32>
    %156 = vector.broadcast %155 : vector<8x1xf32> to vector<8x128xf32>
    %157 = arith.subf %153, %156 : vector<8x128xf32>
    %158 = math.exp %157 : vector<8x128xf32>
    %cst_57 = arith.constant dense<0.000000e+00> : vector<8xf32>
    %159 = vector.multi_reduction <add>, %158, %cst_57 [1] : vector<8x128xf32> to vector<8xf32>
    %160 = vector.shape_cast %159 : vector<8xf32> to vector<8x1xf32>
    %cst_58 = arith.constant 1.562500e-02 : f32
    %161 = vector.broadcast %cst_58 : f32 to vector<8x1xf32>
    %162 = arith.mulf %160, %161 : vector<8x1xf32>
    %163 = vector.broadcast %162 : vector<8x1xf32> to vector<8x128xf32>
    %164 = arith.cmpf ogt, %158, %163 : vector<8x128xf32>
    %165 = arith.extui %164 : vector<8x128xi1> to vector<8x128xi32>
    %166 = arith.sitofp %165 : vector<8x128xi32> to vector<8x128xf32>
    %c0_59 = arith.constant 0 : index
    %c0_60 = arith.constant 0 : index
    %c0_61 = arith.constant 0 : index
    %167 = vector.load %arg4[%c0_59, %c0_60, %c0_61] : memref<1x8x128xf32, #tpu.memory_space<vmem>>, vector<1x8x128xf32>
    %168 = vector.shape_cast %167 : vector<1x8x128xf32> to vector<8x128xf32>
    %169 = vector.shape_cast %166 : vector<8x128xf32> to vector<1x8x128xf32>
    tpu.vector_store %arg4[%c0_59, %c0_60, %c0_61], %169 {strides = array<i32>} : memref<1x8x128xf32, #tpu.memory_space<vmem>>, vector<1x8x128xf32>,
    return
  }
  func.func @transform_0(%arg0: i32) -> (i32, i32, i32) {
    %c0_i32 = arith.constant 0 : i32
    %c0_i32_0 = arith.constant 0 : i32
    %c0_i32_1 = arith.constant 0 : i32
    return %arg0, %c0_i32, %c0_i32_0 : i32, i32, i32
  }
  func.func @transform_1(%arg0: i32) -> (i32, i32, i32) {
    %c0_i32 = arith.constant 0 : i32
    %c0_i32_0 = arith.constant 0 : i32
    %c0_i32_1 = arith.constant 0 : i32
    %c0_i32_2 = arith.constant 0 : i32
    return %c0_i32, %c0_i32_0, %c0_i32_1 : i32, i32, i32
  }
  func.func @transform_2(%arg0: i32) -> (i32, i32) {
    %c0_i32 = arith.constant 0 : i32
    %c0_i32_0 = arith.constant 0 : i32
    %c0_i32_1 = arith.constant 0 : i32
    return %c0_i32, %c0_i32_0 : i32, i32
  }
  func.func @transform_3(%arg0: i32) -> (i32, i32, i32) {
    %c0_i32 = arith.constant 0 : i32
    %c0_i32_0 = arith.constant 0 : i32
    %c0_i32_1 = arith.constant 0 : i32
    return %arg0, %c0_i32, %c0_i32_0 : i32, i32, i32
  }
}

</mosaic_0001>

<llo_original>
// kernel: generator_softmax_stembd.1
$region0: #{generator_softmax_stembd.1}
  #allocation0 [shape = 'u32[]', space=smem, size = 0x4, offset = 0x4, fixed_abs, tag = 'smem constant byte address 0x4 - core index']
  #allocation1 [shape = 'u32[144,128]{1,0:T(1,128)}', space=vmem, size = 0x12000, scoped, tag = 'internal scratch']
  %s0 = inlined_call_operand.vmem [shape: f32[4,8,4], index: 0, kind: input, shape index: {}]
  %s1 = inlined_call_operand.hbm [shape: bf16[3,128,128], index: 1, kind: input, shape index: {}]
  %s2 = inlined_call_operand.vmem [shape: f32[16,128], index: 2, kind: input, shape index: {}]
  %s3 = inlined_call_operand.hbm [shape: f32[4,8,128], index: 3, kind: output, shape index: {}]
  %s4 = sld [smem:[#allocation0]]
  $region49: #{generator_softmax_stembd.1} parent=0
    _
  %s6 = ssub.s32 1, %s4
  %s7 = scalar_select 0, %s6, %s4
  $region1: #{generator_softmax_stembd.1} parent=0
    #allocation2 [shape = 'u8[98304]{0}', space=vmem, size = 0x18000, scoped, tag = 'input window, operand 1, single buffered']
    #allocation3 [shape = 's32[2]{0}', space=sflag, size = 0x8, scoped, tag = 'scoped memory for generator_softmax_stembd.1']
    #allocation4 [shape = 's32[2]{0}', space=sflag, size = 0x8, scoped, tag = 'scoped memory for generator_softmax_stembd.1']
    #allocation5 [shape = 'u8[8192]{0}', space=vmem, size = 0x2000, scoped, tag = 'output window, operand 0']
    %8 = vsyncpa [#allocation3], 0
    %9 = vsyncpa [#allocation4], 0
    %s10 = scalar_lea.sflag [#allocation4], 1
    %11 = vsyncpa %s10, 0
    loop: start=0, step=1, limit=6
    $region2: #{generator_softmax_stembd.1} parent=1 // loop_pre_header
      _
    $region3: #{generator_softmax_stembd.1} parent=1 // loop_header
      %s13 = sphi 0, %s17
      %p14 = scmp.ge.s32.totalorder %s13, 6
      %s23 = sphi 0, %s25
      %s26 = sphi 0, %s23
      %s27 = sphi 0, %s26
      %s43 = sphi 0, %s27
      %s47 = sphi 0, %s47
      %s49 = sphi 0, %s47
      %s50 = sphi 0, %s49
      %s64 = sphi 0, %s50
      %s68 = sphi 0, %s68
      %s70 = sphi 0, %s68
      %s71 = sphi 0, %s70
      %s85 = sphi 0, %s71
      %s91 = sphi 0, %s93
      %s94 = sphi 0, %s91
      %s95 = sphi 0, %s94
      %s111 = sphi 0, %s95
    $region4: #{generator_softmax_stembd.1} parent=1 // loop_header_branch
      %16 = sbr.rel (%p14) target = $region8
    $region5: #{generator_softmax_stembd.1} parent=1 // loop_body
      %s18 = ssub.s32 %s13, 1
      %s19 = ssub.s32 %s13, 2
      %s20 = sadd.s32 %s13, 1
      %s21 = ssub.s32 %s13, %s20
      %p22 = scmp.eq.s32.totalorder %s21, 0
      %s24 = sadd.s32 %s23, 1
      %s25 = scalar_select %p22, %s23, %s24
      %p28 = pneg %p22
      %p29 = scmp.eq.s32.totalorder %s13, 3
      %p30 = por %p28, %p29
      %p31 = scmp.ne.s32.totalorder %s23, %s26
      %p32 = scmp.eq.s32.totalorder %s13, 0
      %p33 = por %p31, %p32
      %p34 = scmp.ne.s32.totalorder %s23, %s26
      %p35 = scmp.eq.s32.totalorder %s18, 3
      %p36 = por %p34, %p35
      %p37 = scmp.ne.s32.totalorder %s26, %s27
      %p38 = scmp.eq.s32.totalorder %s18, 0
      %p39 = por %p37, %p38
      %p40 = scmp.ne.s32.totalorder %s26, %s27
      %p41 = scmp.eq.s32.totalorder %s19, 3
      %p42 = por %p40, %p41
      %p44 = scmp.ne.s32.totalorder %s27, %s43
      %p45 = scmp.eq.s32.totalorder %s19, 0
      %p46 = por %p44, %p45
      %s48 = sadd.s32 %s47, 1
      %p51 = scmp.eq.s32.totalorder %s13, 3
      %p52 = scmp.ne.s32.totalorder %s47, %s49
      %p53 = scmp.eq.s32.totalorder %s13, 0
      %p54 = por %p52, %p53
      %p55 = scmp.ne.s32.totalorder %s47, %s49
      %p56 = scmp.eq.s32.totalorder %s18, 3
      %p57 = por %p55, %p56
      %p58 = scmp.ne.s32.totalorder %s49, %s50
      %p59 = scmp.eq.s32.totalorder %s18, 0
      %p60 = por %p58, %p59
      %p61 = scmp.ne.s32.totalorder %s49, %s50
      %p62 = scmp.eq.s32.totalorder %s19, 3
      %p63 = por %p61, %p62
      %p65 = scmp.ne.s32.totalorder %s50, %s64
      %p66 = scmp.eq.s32.totalorder %s19, 0
      %p67 = por %p65, %p66
      %s69 = sadd.s32 %s68, 1
      %p72 = scmp.eq.s32.totalorder %s13, 3
      %p73 = scmp.ne.s32.totalorder %s68, %s70
      %p74 = scmp.eq.s32.totalorder %s13, 0
      %p75 = por %p73, %p74
      %p76 = scmp.ne.s32.totalorder %s68, %s70
      %p77 = scmp.eq.s32.totalorder %s18, 3
      %p78 = por %p76, %p77
      %p79 = scmp.ne.s32.totalorder %s70, %s71
      %p80 = scmp.eq.s32.totalorder %s18, 0
      %p81 = por %p79, %p80
      %p82 = scmp.ne.s32.totalorder %s70, %s71
      %p83 = scmp.eq.s32.totalorder %s19, 3
      %p84 = por %p82, %p83
      %p86 = scmp.ne.s32.totalorder %s71, %s85
      %p87 = scmp.eq.s32.totalorder %s19, 0
      %p88 = por %p86, %p87
      %s89 = ssub.s32 %s13, %s20
      %p90 = scmp.eq.s32.totalorder %s89, 0
      %s92 = sadd.s32 %s91, 1
      %s93 = scalar_select %p90, %s91, %s92
      %p96 = pneg %p90
      %p97 = scmp.eq.s32.totalorder %s13, 3
      %p98 = por %p96, %p97
      %p99 = scmp.ne.s32.totalorder %s91, %s94
      %p100 = scmp.eq.s32.totalorder %s13, 0
      %p101 = por %p99, %p100
      %p102 = scmp.ne.s32.totalorder %s91, %s94
      %p103 = scmp.eq.s32.totalorder %s18, 3
      %p104 = por %p102, %p103
      %p105 = scmp.ne.s32.totalorder %s94, %s95
      %p106 = scmp.eq.s32.totalorder %s18, 0
      %p107 = por %p105, %p106
      %p108 = scmp.ne.s32.totalorder %s94, %s95
      %p109 = scmp.eq.s32.totalorder %s19, 3
      %p110 = por %p108, %p109
      %p112 = scmp.ne.s32.totalorder %s95, %s111
      %p113 = scmp.eq.s32.totalorder %s19, 0
      %p114 = por %p112, %p113
      %p115 = scmp.le.s32.totalorder 1, %s13
      %p116 = scmp.lt.s32.totalorder %s13, 5
      %p117 = pnand %p115, %p116
      %p118 = pneg %p117
      // Predicated region
      $region9: #{generator_softmax_stembd.1} parent=5 // pred_check
        _
      $region10: #{generator_softmax_stembd.1} parent=5 // pred_check_branch
        %120 = sbr.rel (%p117) target = $region12
      $region11: #{generator_softmax_stembd.1} parent=5 // pred_region
        %s121 = ssub.s32 %s13, 1
        // Predicated region
        $region13: #{generator_softmax_stembd.1} parent=11 // pred_check
          %p122 = pneg %p60
        $region14: #{generator_softmax_stembd.1} parent=11 // pred_check_branch
          %124 = sbr.rel (%p122) target = $region16
        $region15: #{generator_softmax_stembd.1} parent=11 // pred_region
          %s126 = ssub.s32 3072, 3072
          %127 = vsyncadd [#allocation3], %s126
          %s128 = sshll.u32 [#allocation2], 4
          %s129 = int_to_ptr.vmem [resolvable:$true] %s128
          %134 = dma.hbm_to_vmem [thread:$0]  %s1, 3072, %s129, [#allocation3], 64, 64, 4
        $region16: #{generator_softmax_stembd.1} parent=11 // pred_fallthru
          _
        // Predicated region
        $region17: #{generator_softmax_stembd.1} parent=11 // pred_check
          %p135 = pneg %p81
        $region18: #{generator_softmax_stembd.1} parent=11 // pred_check_branch
          %137 = sbr.rel (%p135) target = $region20
        $region19: #{generator_softmax_stembd.1} parent=11 // pred_region
          _
        $region20: #{generator_softmax_stembd.1} parent=11 // pred_fallthru
          _
      $region12: #{generator_softmax_stembd.1} parent=5 // pred_fallthru
        _
      %p138 = scmp.lt.s32.totalorder %s13, 4
      // Predicated region
      $region21: #{generator_softmax_stembd.1} parent=5 // pred_check
        %p139 = pneg %p138
      $region22: #{generator_softmax_stembd.1} parent=5 // pred_check_branch
        %141 = sbr.rel (%p139) target = $region24
      $region23: #{generator_softmax_stembd.1} parent=5 // pred_region
        // Predicated region
        $region25: #{generator_softmax_stembd.1} parent=23 // pred_check
          %p142 = pneg %p33
        $region26: #{generator_softmax_stembd.1} parent=23 // pred_check_branch
          %144 = sbr.rel (%p142) target = $region28
        $region27: #{generator_softmax_stembd.1} parent=23 // pred_region
          %p145 = scmp.lt.s32.totalorder %s13, 3
          %s146 = scalar_select %p145, %s13, 3
          %s147 = smul.addr %s146, 8
          %s148 = scalar_lea.vmem %s0, %s147
        $region28: #{generator_softmax_stembd.1} parent=23 // pred_fallthru
          _
      $region24: #{generator_softmax_stembd.1} parent=5 // pred_fallthru
        _
      %p149 = scmp.le.s32.totalorder 1, %s13
      %p150 = scmp.lt.s32.totalorder %s13, 5
      %p151 = pnand %p149, %p150
      %p152 = pneg %p151
      // Predicated region
      $region29: #{generator_softmax_stembd.1} parent=5 // pred_check
        _
      $region30: #{generator_softmax_stembd.1} parent=5 // pred_check_branch
        %154 = sbr.rel (%p151) target = $region32
      $region31: #{generator_softmax_stembd.1} parent=5 // pred_region
        %s155 = ssub.s32 %s13, 1
        // Predicated region
        $region33: #{generator_softmax_stembd.1} parent=31 // pred_check
          %p156 = pneg %p60
        $region34: #{generator_softmax_stembd.1} parent=31 // pred_check_branch
          %158 = sbr.rel (%p156) target = $region36
        $region35: #{generator_softmax_stembd.1} parent=31 // pred_region
          %159 = dma.done [#allocation3], 3072
        $region36: #{generator_softmax_stembd.1} parent=31 // pred_fallthru
          _
        %p160 = scmp.lt.s32.totalorder %s18, 3
        %s161 = scalar_select %p160, %s18, 3
        %s162 = smul.addr %s161, 8
        %s163 = scalar_lea.vmem %s0, %s162
        %p164 = pneg %p39
        %p165 = pneg %p36
        %p166 = pneg %p60
        %p167 = pneg %p57
        %p168 = pneg %p81
        %p169 = pneg %p78
        %p170 = pneg %p107
        %p171 = pneg %p104
        %s172 = sand.u32 %s94, 1
        %s173 = scalar_lea.sflag [#allocation4], %s172
        %s174 = sand.u32 %s94, 1
        %s175 = smul.addr %s174, 8
        %s176 = scalar_lea.vmem [#allocation5], %s175
        %p177 = scmp.lt.s32.totalorder %s18, 3
        %s178 = scalar_select %p177, %s18, 3
        %s179 = smul.addr %s178, 8
        %s180 = scalar_lea.vmem %s0, %s179
        %v182 = vld [vmem:[%s180] sm:$0xff]
        %v183 = vld [vmem:[%s2] sm:$0x1]
        %v184 = vld [vmem:[%s2 + $0xc] sm:$0x1]
        %186 = vset.pattern.permute.xlu0 0
        %187 = vperm.xlu0 %186, %v182
        %v188 = vpop.permute.xlu0 %187
        %v190 = vlaneseq
        %v191 = vshrl.u32 %v190, 7
        %v192 = vsub.s32 0, %v191
        %v193 = vrot.slane %v184, %v192
        %v194 = vmul.f32 %v188, %v193
        %v195 = vlaneseq
        %v196 = vshrl.u32 %v195, 7
        %v197 = vsub.s32 0, %v196
        %v198 = vrot.slane %v183, %v197
        %v199 = vadd.f32 %v198, %v194
        %v200 = vld [vmem:[%s2 + $0xd] sm:$0x1]
        %201 = vset.pattern.permute.xlu0 1
        %202 = vperm.xlu0 %201, %v182
        %v203 = vpop.permute.xlu0 %202
        %v205 = vlaneseq
        %v206 = vshrl.u32 %v205, 7
        %v207 = vsub.s32 0, %v206
        %v208 = vrot.slane %v200, %v207
        %v209 = vmul.f32 %v203, %v208
        %v210 = vadd.f32 %v199, %v209
        %v211 = vld [vmem:[%s2 + $0xe] sm:$0x1]
        %212 = vset.pattern.permute.xlu0 2
        %213 = vperm.xlu0 %212, %v182
        %v214 = vpop.permute.xlu0 %213
        %v216 = vlaneseq
        %v217 = vshrl.u32 %v216, 7
        %v218 = vsub.s32 0, %v217
        %v219 = vrot.slane %v211, %v218
        %v220 = vmul.f32 %v214, %v219
        %v221 = vadd.f32 %v210, %v220
        %v222 = vld [vmem:[%s2 + $0xf] sm:$0x1]
        %223 = vset.pattern.permute.xlu0 3
        %224 = vperm.xlu0 %223, %v182
        %v225 = vpop.permute.xlu0 %224
        %v227 = vlaneseq
        %v228 = vshrl.u32 %v227, 7
        %v229 = vsub.s32 0, %v228
        %v230 = vrot.slane %v222, %v229
        %v231 = vmul.f32 %v225, %v230
        %v232 = vadd.f32 %v221, %v231
        %v233 = vld [vmem:[%s2 + $0x1] sm:$0x1]
        %v234 = vld [vmem:[%s2 + $0x2] sm:$0x1]
        %vm235 = vcmp.gt.f32.partialorder %v232, 0.0
        %v236 = vmul.f32 %v232, 0.2
        %v237 = vsel %vm235, %v232, %v236
        %v238 = vrot.slane %v237, 4
        %v239 = vadd.f32 %v237, %v238
        %v240 = vrot.slane %v239, 2
        %v241 = vadd.f32 %v239, %v240
        %v242 = vrot.slane %v241, 1
        %v243 = vadd.f32 %v241, %v242
        %v244 = vmul.f32 %v243, 0.125
        %v245 = vsub.f32 %v237, %v244
        %v246 = vmul.f32 %v245, %v245
        %v247 = vrot.slane %v246, 4
        %v248 = vadd.f32 %v246, %v247
        %v249 = vrot.slane %v248, 2
        %v250 = vadd.f32 %v248, %v249
        %v251 = vrot.slane %v250, 1
        %v252 = vadd.f32 %v250, %v251
        %v253 = vmul.f32 %v252, 0.125
        %v254 = vadd.f32 %v253, 1e-05
        %v255 = vrsqrt.pop %v254
        %v256 = vmul.f32 %v233, %v255
        %v257 = vlaneseq
        %v258 = vshrl.u32 %v257, 7
        %v259 = vsub.s32 0, %v258
        %v260 = vrot.slane %v256, %v259
        %v261 = vmul.f32 %v245, %v260
        %v262 = vlaneseq
        %v263 = vshrl.u32 %v262, 7
        %v264 = vsub.s32 0, %v263
        %v265 = vrot.slane %v234, %v264
        %v266 = vadd.f32 %v261, %v265
        %v267 = vpack.c.bf16 %v266, %v266
        %v268 = vld [vmem:[#allocation2] sm:$0xf]
        %v269 = vld [vmem:[#allocation2 + $0x4] sm:$0xf]
        %v270 = vld [vmem:[#allocation2 + $0x8] sm:$0xf]
        %v271 = vld [vmem:[#allocation2 + $0xc] sm:$0xf]
        %v272 = vld [vmem:[#allocation2 + $0x10] sm:$0xf]
        %v273 = vld [vmem:[#allocation2 + $0x14] sm:$0xf]
        %v274 = vld [vmem:[#allocation2 + $0x18] sm:$0xf]
        %v275 = vld [vmem:[#allocation2 + $0x1c] sm:$0xf]
        %v276 = vld [vmem:[#allocation2 + $0x20] sm:$0xf]
        %v277 = vld [vmem:[#allocation2 + $0x24] sm:$0xf]
        %v278 = vld [vmem:[#allocation2 + $0x28] sm:$0xf]
        %v279 = vld [vmem:[#allocation2 + $0x2c] sm:$0xf]
        %v280 = vld [vmem:[#allocation2 + $0x30] sm:$0xf]
        %v281 = vld [vmem:[#allocation2 + $0x34] sm:$0xf]
        %v282 = vld [vmem:[#allocation2 + $0x38] sm:$0xf]
        %v283 = vld [vmem:[#allocation2 + $0x3c] sm:$0xf]
        %v284 = vld [vmem:[%s2 + $0x3] sm:$0x1]
        %v285 = vlaneseq
        %v286 = vshrl.u32 %v285, 7
        %v287 = vsub.s32 0, %v286
        %v288 = vrot.slane %v284, %v287
        %v305 = vunpack.c.l.b16 %v268
        %v306 = vunpack.c.l.b16 %v269
        %v307 = vunpack.c.l.b16 %v270
        %v308 = vunpack.c.l.b16 %v271
        %v309 = vunpack.c.l.b16 %v272
        %v310 = vunpack.c.l.b16 %v273
        %v311 = vunpack.c.l.b16 %v274
        %v312 = vunpack.c.l.b16 %v275
        %v313 = vunpack.c.l.b16 %v276
        %v314 = vunpack.c.l.b16 %v277
        %v315 = vunpack.c.l.b16 %v278
        %v316 = vunpack.c.l.b16 %v279
        %v317 = vunpack.c.l.b16 %v280
        %v318 = vunpack.c.l.b16 %v281
        %v319 = vunpack.c.l.b16 %v282
        %v320 = vunpack.c.l.b16 %v283
        %v321 = vpack.c.b16 %v306, %v305
        %v322 = vpack.c.b16 %v308, %v307
        %v323 = vpack.c.b16 %v310, %v309
        %v324 = vpack.c.b16 %v312, %v311
        %v325 = vpack.c.b16 %v314, %v313
        %v326 = vpack.c.b16 %v316, %v315
        %v327 = vpack.c.b16 %v318, %v317
        %v328 = vpack.c.b16 %v320, %v319
        %337 = vmatprep.subr.bf16.mxu0 0
        %338 = vmatpush1.bf16.msra.mxu0 %v321
        %339 = vmatprep.subr.bf16.mxu0 0
        %340 = vmatpush1.bf16.msra.mxu0 %v322
        %341 = vmatprep.subr.bf16.mxu0 0
        %342 = vmatpush1.bf16.msra.mxu0 %v323
        %343 = vmatprep.subr.bf16.mxu0 0
        %344 = vmatpush1.bf16.msra.mxu0 %v324
        %345 = vmatprep.subr.bf16.mxu0 0
        %346 = vmatpush1.bf16.msra.mxu0 %v325
        %347 = vmatprep.subr.bf16.mxu0 0
        %348 = vmatpush1.bf16.msra.mxu0 %v326
        %349 = vmatprep.subr.bf16.mxu0 0
        %350 = vmatpush1.bf16.msra.mxu0 %v327
        %351 = vmatprep.subr.bf16.mxu0 0
        %352 = vmatpush1.bf16.msra.mxu0 %v328
        %353 = vmatprep.subr.bf16.mxu0 0
        %354 = vmatpush1.bf16.msra.mxu0 0
        %355 = vmatprep.subr.bf16.mxu0 0
        %356 = vmatpush1.bf16.msra.mxu0 0
        %357 = vmatprep.subr.bf16.mxu0 0
        %358 = vmatpush1.bf16.msra.mxu0 0
        %359 = vmatprep.subr.bf16.mxu0 0
        %360 = vmatpush1.bf16.msra.mxu0 0
        %361 = vmatprep.subr.bf16.mxu0 0
        %362 = vmatpush1.bf16.msra.mxu0 0
        %363 = vmatprep.subr.bf16.mxu0 0
        %364 = vmatpush1.bf16.msra.mxu0 0
        %365 = vmatprep.subr.bf16.mxu0 0
        %366 = vmatpush1.bf16.msra.mxu0 0
        %367 = vmatprep.subr.bf16.mxu0 0
        %368 = vmatpush1.bf16.msra.mxu0 0
        %369 = vmatprep.mubr.bf16.mxu0 0
        %370 = vmatmul.mubr.bf16.gmra.mrb[0].mxu0 %v267
        %v371 = vpop.f32.mrb[0].mxu0
        %v372 = vadd.f32 %v288, %v371
        %v373 = vpop.f32.mrb[0].mxu0
        %v374 = vpop.f32.mrb[0].mxu0
        %v375 = vpop.f32.mrb[0].mxu0
        %376 = vdwg.mxu0
        %v377 = vld [vmem:[%s2 + $0x4] sm:$0x1]
        %v378 = vld [vmem:[%s2 + $0x5] sm:$0x1]
        %vm379 = vcmp.gt.f32.partialorder %v372, 0.0
        %v380 = vmul.f32 %v372, 0.2
        %v381 = vsel %vm379, %v372, %v380
        %v382 = vrot.slane %v381, 4
        %v383 = vadd.f32 %v381, %v382
        %v384 = vrot.slane %v383, 2
        %v385 = vadd.f32 %v383, %v384
        %v386 = vrot.slane %v385, 1
        %v387 = vadd.f32 %v385, %v386
        %v388 = vmul.f32 %v387, 0.125
        %v389 = vsub.f32 %v381, %v388
        %v390 = vmul.f32 %v389, %v389
        %v391 = vrot.slane %v390, 4
        %v392 = vadd.f32 %v390, %v391
        %v393 = vrot.slane %v392, 2
        %v394 = vadd.f32 %v392, %v393
        %v395 = vrot.slane %v394, 1
        %v396 = vadd.f32 %v394, %v395
        %v397 = vmul.f32 %v396, 0.125
        %v398 = vadd.f32 %v397, 1e-05
        %v399 = vrsqrt.pop %v398
        %v400 = vmul.f32 %v377, %v399
        %v401 = vlaneseq
        %v402 = vshrl.u32 %v401, 7
        %v403 = vsub.s32 0, %v402
        %v404 = vrot.slane %v400, %v403
        %v405 = vmul.f32 %v389, %v404
        %v406 = vlaneseq
        %v407 = vshrl.u32 %v406, 7
        %v408 = vsub.s32 0, %v407
        %v409 = vrot.slane %v378, %v408
        %v410 = vadd.f32 %v405, %v409
        %v411 = vpack.c.bf16 %v410, %v410
        %s412 = scalar_lea.vmem [#allocation2], 64
        %v413 = vld [vmem:[%s412] sm:$0xf]
        %v414 = vld [vmem:[%s412 + $0x4] sm:$0xf]
        %v415 = vld [vmem:[%s412 + $0x8] sm:$0xf]
        %v416 = vld [vmem:[%s412 + $0xc] sm:$0xf]
        %v417 = vld [vmem:[%s412 + $0x10] sm:$0xf]
        %v418 = vld [vmem:[%s412 + $0x14] sm:$0xf]
        %v419 = vld [vmem:[%s412 + $0x18] sm:$0xf]
        %v420 = vld [vmem:[%s412 + $0x1c] sm:$0xf]
        %v421 = vld [vmem:[%s412 + $0x20] sm:$0xf]
        %v422 = vld [vmem:[%s412 + $0x24] sm:$0xf]
        %v423 = vld [vmem:[%s412 + $0x28] sm:$0xf]
        %v424 = vld [vmem:[%s412 + $0x2c] sm:$0xf]
        %v425 = vld [vmem:[%s412 + $0x30] sm:$0xf]
        %v426 = vld [vmem:[%s412 + $0x34] sm:$0xf]
        %v427 = vld [vmem:[%s412 + $0x38] sm:$0xf]
        %v428 = vld [vmem:[%s412 + $0x3c] sm:$0xf]
        %v429 = vld [vmem:[%s2 + $0x6] sm:$0x1]
        %v430 = vlaneseq
        %v431 = vshrl.u32 %v430, 7
        %v432 = vsub.s32 0, %v431
        %v433 = vrot.slane %v429, %v432
        %v450 = vunpack.c.l.b16 %v413
        %v451 = vunpack.c.l.b16 %v414
        %v452 = vunpack.c.l.b16 %v415
        %v453 = vunpack.c.l.b16 %v416
        %v454 = vunpack.c.l.b16 %v417
        %v455 = vunpack.c.l.b16 %v418
        %v456 = vunpack.c.l.b16 %v419
        %v457 = vunpack.c.l.b16 %v420
        %v458 = vunpack.c.l.b16 %v421
        %v459 = vunpack.c.l.b16 %v422
        %v460 = vunpack.c.l.b16 %v423
        %v461 = vunpack.c.l.b16 %v424
        %v462 = vunpack.c.l.b16 %v425
        %v463 = vunpack.c.l.b16 %v426
        %v464 = vunpack.c.l.b16 %v427
        %v465 = vunpack.c.l.b16 %v428
        %v466 = vpack.c.b16 %v451, %v450
        %v467 = vpack.c.b16 %v453, %v452
        %v468 = vpack.c.b16 %v455, %v454
        %v469 = vpack.c.b16 %v457, %v456
        %v470 = vpack.c.b16 %v459, %v458
        %v471 = vpack.c.b16 %v461, %v460
        %v472 = vpack.c.b16 %v463, %v462
        %v473 = vpack.c.b16 %v465, %v464
        %482 = vmatprep.subr.bf16.mxu0 0
        %483 = vmatpush1.bf16.msra.mxu0 %v466
        %484 = vmatprep.subr.bf16.mxu0 0
        %485 = vmatpush1.bf16.msra.mxu0 %v467
        %486 = vmatprep.subr.bf16.mxu0 0
        %487 = vmatpush1.bf16.msra.mxu0 %v468
        %488 = vmatprep.subr.bf16.mxu0 0
        %489 = vmatpush1.bf16.msra.mxu0 %v469
        %490 = vmatprep.subr.bf16.mxu0 0
        %491 = vmatpush1.bf16.msra.mxu0 %v470
        %492 = vmatprep.subr.bf16.mxu0 0
        %493 = vmatpush1.bf16.msra.mxu0 %v471
        %494 = vmatprep.subr.bf16.mxu0 0
        %495 = vmatpush1.bf16.msra.mxu0 %v472
        %496 = vmatprep.subr.bf16.mxu0 0
        %497 = vmatpush1.bf16.msra.mxu0 %v473
        %498 = vmatprep.subr.bf16.mxu0 0
        %499 = vmatpush1.bf16.msra.mxu0 0
        %500 = vmatprep.subr.bf16.mxu0 0
        %501 = vmatpush1.bf16.msra.mxu0 0
        %502 = vmatprep.subr.bf16.mxu0 0
        %503 = vmatpush1.bf16.msra.mxu0 0
        %504 = vmatprep.subr.bf16.mxu0 0
        %505 = vmatpush1.bf16.msra.mxu0 0
        %506 = vmatprep.subr.bf16.mxu0 0
        %507 = vmatpush1.bf16.msra.mxu0 0
        %508 = vmatprep.subr.bf16.mxu0 0
        %509 = vmatpush1.bf16.msra.mxu0 0
        %510 = vmatprep.subr.bf16.mxu0 0
        %511 = vmatpush1.bf16.msra.mxu0 0
        %512 = vmatprep.subr.bf16.mxu0 0
        %513 = vmatpush1.bf16.msra.mxu0 0
        %514 = vmatprep.mubr.bf16.mxu0 0
        %515 = vmatmul.mubr.bf16.gmra.mrb[0].mxu0 %v411
        %v516 = vpop.f32.mrb[0].mxu0
        %v517 = vadd.f32 %v433, %v516
        %v518 = vpop.f32.mrb[0].mxu0
        %v519 = vpop.f32.mrb[0].mxu0
        %v520 = vpop.f32.mrb[0].mxu0
        %521 = vdwg.mxu0
        %v522 = vld [vmem:[%s2 + $0x7] sm:$0x1]
        %v523 = vld [vmem:[%s2 + $0x8] sm:$0x1]
        %vm524 = vcmp.gt.f32.partialorder %v517, 0.0
        %v525 = vmul.f32 %v517, 0.2
        %v526 = vsel %vm524, %v517, %v525
        %v527 = vrot.slane %v526, 4
        %v528 = vadd.f32 %v526, %v527
        %v529 = vrot.slane %v528, 2
        %v530 = vadd.f32 %v528, %v529
        %v531 = vrot.slane %v530, 1
        %v532 = vadd.f32 %v530, %v531
        %v533 = vmul.f32 %v532, 0.125
        %v534 = vsub.f32 %v526, %v533
        %v535 = vmul.f32 %v534, %v534
        %v536 = vrot.slane %v535, 4
        %v537 = vadd.f32 %v535, %v536
        %v538 = vrot.slane %v537, 2
        %v539 = vadd.f32 %v537, %v538
        %v540 = vrot.slane %v539, 1
        %v541 = vadd.f32 %v539, %v540
        %v542 = vmul.f32 %v541, 0.125
        %v543 = vadd.f32 %v542, 1e-05
        %v544 = vrsqrt.pop %v543
        %v545 = vmul.f32 %v522, %v544
        %v546 = vlaneseq
        %v547 = vshrl.u32 %v546, 7
        %v548 = vsub.s32 0, %v547
        %v549 = vrot.slane %v545, %v548
        %v550 = vmul.f32 %v534, %v549
        %v551 = vlaneseq
        %v552 = vshrl.u32 %v551, 7
        %v553 = vsub.s32 0, %v552
        %v554 = vrot.slane %v523, %v553
        %v555 = vadd.f32 %v550, %v554
        %v556 = vld [vmem:[%s2 + $0x9] sm:$0x1]
        %v557 = vlaneseq
        %v558 = vshrl.u32 %v557, 7
        %v559 = vsub.s32 0, %v558
        %v560 = vrot.slane %v556, %v559
        %v561 = vmul.f32 %v555, %v560
        %562 = vadd.xlane.f32.xlu0 %v561
        %v563 = vpop.xlane.xlu0 %562
        %564 = vxpose.xlu0.b32.start [1/16] %v563, 128
        %565 = vxpose.xlu0.b32.cont [2/16] 0.0, 128
        %566 = vxpose.xlu0.b32.cont [3/16] 0.0, 128
        %567 = vxpose.xlu0.b32.cont [4/16] 0.0, 128
        %568 = vxpose.xlu0.b32.cont [5/16] 0.0, 128
        %569 = vxpose.xlu0.b32.cont [6/16] 0.0, 128
        %570 = vxpose.xlu0.b32.cont [7/16] 0.0, 128
        %571 = vxpose.xlu0.b32.cont [8/16] 0.0, 128
        %572 = vxpose.xlu0.b32.cont [9/16] 0.0, 128
        %573 = vxpose.xlu0.b32.cont [10/16] 0.0, 128
        %574 = vxpose.xlu0.b32.cont [11/16] 0.0, 128
        %575 = vxpose.xlu0.b32.cont [12/16] 0.0, 128
        %576 = vxpose.xlu0.b32.cont [13/16] 0.0, 128
        %577 = vxpose.xlu0.b32.cont [14/16] 0.0, 128
        %578 = vxpose.xlu0.b32.cont [15/16] 0.0, 128
        %579 = vxpose.xlu0.b32.end [16/16] 0.0, 128
        %v580 = vpop.trf.xlu0
        %v581 = vpop.trf.xlu0
        %v582 = vpop.trf.xlu0
        %v583 = vpop.trf.xlu0
        %v584 = vpop.trf.xlu0
        %v585 = vpop.trf.xlu0
        %v586 = vpop.trf.xlu0
        %v587 = vpop.trf.xlu0
        %v588 = vpop.trf.xlu0
        %v589 = vpop.trf.xlu0
        %v590 = vpop.trf.xlu0
        %v591 = vpop.trf.xlu0
        %v592 = vpop.trf.xlu0
        %v593 = vpop.trf.xlu0
        %v594 = vpop.trf.xlu0
        %v595 = vpop.trf.xlu0
        %v596 = vlaneseq
        %v597 = vshrl.u32 %v596, 7
        %v598 = vsub.s32 0, %v597
        %v599 = vrot.slane %v580, %v598
        %v600 = vsub.f32 %v563, %v599
        %v601 = vand.u32 2147483647, %v600
        %v602 = vsub.f32 0.0, %v601
        %v603 = vmul.f32 %v602, 1.442695
        %v604 = vpow.pop %v603
        %vm605 = vcmask 64512
        %v606 = vsel %vm605, %v604, 0.0
        %607 = vadd.xlane.f32.xlu0 %v606
        %v608 = vpop.xlane.xlu0 %607
        %v609 = vsub.f32 %v608, 1.0
        %v610 = vld [vmem:[%s2 + $0xa] sm:$0x1]
        %v611 = vld [vmem:[%s2 + $0xb] sm:$0x1]
        %v612 = vpack.c.bf16 %v555, %v555
        %s613 = scalar_lea.vmem [#allocation2], 128
        %v614 = vld [vmem:[%s613] sm:$0xf]
        %v615 = vld [vmem:[%s613 + $0x4] sm:$0xf]
        %v616 = vld [vmem:[%s613 + $0x8] sm:$0xf]
        %v617 = vld [vmem:[%s613 + $0xc] sm:$0xf]
        %v618 = vld [vmem:[%s613 + $0x10] sm:$0xf]
        %v619 = vld [vmem:[%s613 + $0x14] sm:$0xf]
        %v620 = vld [vmem:[%s613 + $0x18] sm:$0xf]
        %v621 = vld [vmem:[%s613 + $0x1c] sm:$0xf]
        %v622 = vld [vmem:[%s613 + $0x20] sm:$0xf]
        %v623 = vld [vmem:[%s613 + $0x24] sm:$0xf]
        %v624 = vld [vmem:[%s613 + $0x28] sm:$0xf]
        %v625 = vld [vmem:[%s613 + $0x2c] sm:$0xf]
        %v626 = vld [vmem:[%s613 + $0x30] sm:$0xf]
        %v627 = vld [vmem:[%s613 + $0x34] sm:$0xf]
        %v628 = vld [vmem:[%s613 + $0x38] sm:$0xf]
        %v629 = vld [vmem:[%s613 + $0x3c] sm:$0xf]
        %v630 = vlaneseq
        %v631 = vshrl.u32 %v630, 7
        %v632 = vsub.s32 0, %v631
        %v633 = vrot.slane %v610, %v632
        %v634 = vmul.f32 %v609, %v633
        %v651 = vunpack.c.l.b16 %v614
        %v652 = vunpack.c.l.b16 %v615
        %v653 = vunpack.c.l.b16 %v616
        %v654 = vunpack.c.l.b16 %v617
        %v655 = vunpack.c.l.b16 %v618
        %v656 = vunpack.c.l.b16 %v619
        %v657 = vunpack.c.l.b16 %v620
        %v658 = vunpack.c.l.b16 %v621
        %v659 = vunpack.c.l.b16 %v622
        %v660 = vunpack.c.l.b16 %v623
        %v661 = vunpack.c.l.b16 %v624
        %v662 = vunpack.c.l.b16 %v625
        %v663 = vunpack.c.l.b16 %v626
        %v664 = vunpack.c.l.b16 %v627
        %v665 = vunpack.c.l.b16 %v628
        %v666 = vunpack.c.l.b16 %v629
        %v667 = vpack.c.b16 %v652, %v651
        %v668 = vpack.c.b16 %v654, %v653
        %v669 = vpack.c.b16 %v656, %v655
        %v670 = vpack.c.b16 %v658, %v657
        %v671 = vpack.c.b16 %v660, %v659
        %v672 = vpack.c.b16 %v662, %v661
        %v673 = vpack.c.b16 %v664, %v663
        %v674 = vpack.c.b16 %v666, %v665
        %683 = vmatprep.subr.bf16.mxu0 0
        %684 = vmatpush1.bf16.msra.mxu0 %v667
        %685 = vmatprep.subr.bf16.mxu0 0
        %686 = vmatpush1.bf16.msra.mxu0 %v668
        %687 = vmatprep.subr.bf16.mxu0 0
        %688 = vmatpush1.bf16.msra.mxu0 %v669
        %689 = vmatprep.subr.bf16.mxu0 0
        %690 = vmatpush1.bf16.msra.mxu0 %v670
        %691 = vmatprep.subr.bf16.mxu0 0
        %692 = vmatpush1.bf16.msra.mxu0 %v671
        %693 = vmatprep.subr.bf16.mxu0 0
        %694 = vmatpush1.bf16.msra.mxu0 %v672
        %695 = vmatprep.subr.bf16.mxu0 0
        %696 = vmatpush1.bf16.msra.mxu0 %v673
        %697 = vmatprep.subr.bf16.mxu0 0
        %698 = vmatpush1.bf16.msra.mxu0 %v674
        %699 = vmatprep.subr.bf16.mxu0 0
        %700 = vmatpush1.bf16.msra.mxu0 0
        %701 = vmatprep.subr.bf16.mxu0 0
        %702 = vmatpush1.bf16.msra.mxu0 0
        %703 = vmatprep.subr.bf16.mxu0 0
        %704 = vmatpush1.bf16.msra.mxu0 0
        %705 = vmatprep.subr.bf16.mxu0 0
        %706 = vmatpush1.bf16.msra.mxu0 0
        %707 = vmatprep.subr.bf16.mxu0 0
        %708 = vmatpush1.bf16.msra.mxu0 0
        %709 = vmatprep.subr.bf16.mxu0 0
        %710 = vmatpush1.bf16.msra.mxu0 0
        %711 = vmatprep.subr.bf16.mxu0 0
        %712 = vmatpush1.bf16.msra.mxu0 0
        %713 = vmatprep.subr.bf16.mxu0 0
        %714 = vmatpush1.bf16.msra.mxu0 0
        %715 = vmatprep.mubr.bf16.mxu0 0
        %716 = vmatmul.mubr.bf16.gmra.mrb[0].mxu0 %v612
        %v717 = vpop.f32.mrb[0].mxu0
        %v718 = vadd.f32 %v634, %v717
        %v719 = vpop.f32.mrb[0].mxu0
        %v720 = vpop.f32.mrb[0].mxu0
        %v721 = vpop.f32.mrb[0].mxu0
        %722 = vdwg.mxu0
        %v723 = vlaneseq
        %v724 = vshrl.u32 %v723, 7
        %v725 = vsub.s32 0, %v724
        %v726 = vrot.slane %v611, %v725
        %v727 = vadd.f32 %v718, %v726
        %v728 = vlaneseq
        %v729 = vand.u32 %v728, 127
        %vm730 = vcmp.lt.s32.totalorder %v729, 64
        %v731 = vsel %vm730, %v727, -1e+30
        %732 = vmax.xlane.f32.xlu0 %v731
        %v733 = vpop.xlane.xlu0 %732
        %v734 = vsub.f32 %v731, %v733
        %v735 = vmul.f32 %v734, 1.442695
        %v736 = vpow.pop %v735
        %737 = vadd.xlane.f32.xlu0 %v736
        %v738 = vpop.xlane.xlu0 %737
        %v739 = vmul.f32 %v738, 0.015625
        %vm740 = vcmp.gt.f32.partialorder %v736, %v739
        %v741 = vsel %vm740, 1, 0
        %v742 = vcvt.s32.f32 %v741
        %743 = vst [vmem:[%s176] sm:$0xff] %v742
        %s744 = sand.u32 %s94, 1
        %s745 = scalar_lea.sflag [#allocation4], %s744
        %s746 = sand.u32 %s94, 1
        %s747 = smul.addr %s746, 8
        %s748 = scalar_lea.vmem [#allocation5], %s747
        // Predicated region
        $region37: #{generator_softmax_stembd.1} parent=31 // pred_check
          %p749 = pneg %p104
        $region38: #{generator_softmax_stembd.1} parent=31 // pred_check_branch
          %751 = sbr.rel (%p749) target = $region40
        $region39: #{generator_softmax_stembd.1} parent=31 // pred_region
          %s753 = ssub.s32 128, 128
          %754 = vsyncadd %s745, %s753
          %s755 = smul.addr %s18, 128
          %s756 = scalar_lea.hbm %s3, %s755
          %s758 = sshll.u32 %s748, 4
          %s759 = int_to_ptr.vmem [resolvable:$true] %s758
          %761 = dma.vmem_to_hbm [thread:$0]  %s759, 128, %s756, %s745
        $region40: #{generator_softmax_stembd.1} parent=31 // pred_fallthru
          _
      $region32: #{generator_softmax_stembd.1} parent=5 // pred_fallthru
        _
      %p762 = scmp.le.s32.totalorder 2, %s13
      // Predicated region
      $region41: #{generator_softmax_stembd.1} parent=5 // pred_check
        %p763 = pneg %p762
      $region42: #{generator_softmax_stembd.1} parent=5 // pred_check_branch
        %765 = sbr.rel (%p763) target = $region44
      $region43: #{generator_softmax_stembd.1} parent=5 // pred_region
        %s766 = ssub.s32 %s13, 2
        // Predicated region
        $region45: #{generator_softmax_stembd.1} parent=43 // pred_check
          %p767 = pneg %p110
        $region46: #{generator_softmax_stembd.1} parent=43 // pred_check_branch
          %769 = sbr.rel (%p767) target = $region48
        $region47: #{generator_softmax_stembd.1} parent=43 // pred_region
          %s770 = sand.u32 %s95, 1
          %s771 = scalar_lea.sflag [#allocation4], %s770
          %s772 = sand.u32 %s95, 1
          %s773 = smul.addr %s772, 8
          %s774 = scalar_lea.vmem [#allocation5], %s773
          %775 = dma.done %s771, 128
        $region48: #{generator_softmax_stembd.1} parent=43 // pred_fallthru
          _
      $region44: #{generator_softmax_stembd.1} parent=5 // pred_fallthru
        _
    $region6: #{generator_softmax_stembd.1} parent=1 // loop_footer
      %s17 = sadd.s32 1, %s13
    $region7: #{generator_softmax_stembd.1} parent=1 // loop_footer_branch
      %12 = sbr.rel target = $region3
    $region8: #{generator_softmax_stembd.1} parent=1 // loop_exit
      _
    %776 = vsyncpa [#allocation3], 1
    %s777 = scalar_lea.sflag [#allocation3], 1
    %778 = vsyncpa %s777, 1
    %779 = vsyncpa [#allocation4], 1
    %s780 = scalar_lea.sflag [#allocation4], 1
    %781 = vsyncpa %s780, 1

</llo_original>
